<compile_context>
chip_gen: v6e
topology: v6e:2x2x1
jax: 0.10.0
libtpu: 0.0.40
codegen_flags: <defaults>
</compile_context>

<pallas_src>
import numpy as np
import jax
import jax.numpy as jnp
from jax import lax
from jax.experimental import pallas as pl
from jax.experimental.pallas import tpu as pltpu

# ---- OptimLayer hyper-parameters (kwargs in the torch module) ----------------------
SIZE = 8              # seq_len / number of trajectory nodes
MAX_ITERATIONS = 10   # LM outer iterations
DAMPING = 0.1         # LM damping (added to the normal-equation diagonal)

# ---- substitute aerodynamic model constants -----------------------------------------
KD = 0.1              # linear drag on v
KW = 0.05             # linear decay on w
KB = 0.01             # coupling of height b0 = p_z into v
GRAVITY = np.array([0.0, 0.0, -9.81], dtype=np.float32)

# ---- problem sizes -------------------------------------------------------------------
NVAR = 9 * SIZE            # 72 optimized scalars per batch element
NRES = 12 * SIZE - 6       # 90 residual rows per batch element
NP = 128                   # padded variable dim (lane-friendly) for the kernel

# ---- cost weights (deterministic, from __init__) -------------------------------------
P_NOISE, V_NOISE, W_NOISE = 0.01, 0.001, 0.1

BT_CAP = 64                # max batch elements per grid step (~2 MiB bf16 M block)


def _pcol(i): return 9 * i
def _vcol(i): return 9 * i + 3
def _wcol(i): return 9 * i + 6


def _build_weights_np():
    """Diagonal cost weights per residual row."""
    w = np.zeros((NRES,), np.float32)
    p_w = 1.0 / P_NOISE
    wv_w = np.array([1.0 / V_NOISE] * 3 + [1.0 / W_NOISE] * 3, np.float32)
    w0_w = 1.0 / W_NOISE
    row = 0
    w[row:row + 3 * SIZE] = p_w                      # position priors
    row += 3 * SIZE
    w[row:row + 3 * (SIZE - 1)] = p_w                # position dynamics
    row += 3 * (SIZE - 1)
    for _ in range(1, SIZE):                         # v/w dynamics
        w[row:row + 6] = wv_w
        row += 6
    w[row:row + 3] = w0_w                            # w0 prior
    row += 3
    assert row == NRES
    return w


def _build_static_jacobian_np():
    """Static Jacobian decomposition J(dt) = J_CONST + sum_k dt_k * BASIS[k]."""
    Jc = np.zeros((NRES, NVAR), np.float32)
    basis = np.zeros((SIZE - 1, NRES, NVAR), np.float32)
    I3 = np.eye(3, dtype=np.float32)
    row = 0
    # --- position priors: p_i - p_prior_i
    for i in range(SIZE):
        Jc[row:row + 3, _pcol(i):_pcol(i) + 3] = I3
        row += 3
    # --- position dynamics: p_i - (p_{i-1} + v_{i-1} * dt_{i-1})
    for i in range(1, SIZE):
        Jc[row:row + 3, _pcol(i):_pcol(i) + 3] = I3
        Jc[row:row + 3, _pcol(i - 1):_pcol(i - 1) + 3] = -I3
        basis[i - 1, row:row + 3, _vcol(i - 1):_vcol(i - 1) + 3] = -I3
        row += 3
    # --- v/w dynamics with substitute model:
    #     v1_est = (1 - KD*dt)*v0 + KB*dt*b0 + dt*g,  w1_est = (1 - KW*dt)*w0
    for i in range(1, SIZE):
        # v rows: v1_est - v_i
        Jc[row:row + 3, _vcol(i - 1):_vcol(i - 1) + 3] = I3
        basis[i - 1, row:row + 3, _vcol(i - 1):_vcol(i - 1) + 3] = -KD * I3
        basis[i - 1, row:row + 3, _pcol(i - 1) + 2] = KB
        Jc[row:row + 3, _vcol(i):_vcol(i) + 3] = -I3
        row += 3
        # w rows: w1_est - w_i
        Jc[row:row + 3, _wcol(i - 1):_wcol(i - 1) + 3] = I3
        basis[i - 1, row:row + 3, _wcol(i - 1):_wcol(i - 1) + 3] = -KW * I3
        Jc[row:row + 3, _wcol(i):_wcol(i) + 3] = -I3
        row += 3
    # --- w0 prior: w_0 - w_prior_0
    Jc[row:row + 3, _wcol(0):_wcol(0) + 3] = I3
    row += 3
    assert row == NRES
    return Jc, basis


_WDIAG = jnp.asarray(_build_weights_np())                       # (NRES,)
_Jc_np, _Basis_np = _build_static_jacobian_np()
_J_CONST = jnp.asarray(_Jc_np)                                  # (NRES, NVAR)
_J_DT_BASIS = jnp.asarray(_Basis_np)                            # (SIZE-1, NRES, NVAR)


# ---------------------------- Pallas kernel -------------------------------------------
def _lm_kernel(m_ref, b_ref, th0_ref, out_ref):
    """Fused damped Gauss-Newton / LM fixed-point loop.

    Per batch element the whole LM step is the affine map  theta <- theta @ M + b
    in lane-dense row layout (M passed in bf16; theta/b and accumulation stay f32).
    BT independent (1,128)@(128,128) matvecs per einsum interleave on the MXU.
    """
    M = m_ref[...]          # (BT, NP, NP)  bf16   I - G @ Ainv   (row form)
    b = b_ref[...]          # (BT, 1, NP)   f32    -g0 @ Ainv     (row form)
    theta0 = th0_ref[...]   # (BT, 1, NP)   f32

    def lm_iter(_, theta):
        return jnp.einsum('bon,bnm->bom', theta.astype(M.dtype), M,
                          preferred_element_type=jnp.float32) + b

    out_ref[...] = lax.fori_loop(0, MAX_ITERATIONS, lm_iter, theta0, unroll=True)


# ---------------------------- wrapper (glue) -------------------------------------------
def optim_layer_forward(x, w0=None):
    """
    args:
        x  = [b, seq_len, 4]   columns: [t, px, py, pz]
        w0 = [b, 1, 3] or None
    returns:
        p0 = [b, 1, 3], v0 = [b, 1, 3], w0 = [b, 1, 3]
    """
    B, S, _ = x.shape
    assert S == SIZE
    x = x.astype(jnp.float32)
    if w0 is None:
        w0 = jnp.zeros((B, 1, 3), jnp.float32)
    w0_flat = w0[:, 0, :].astype(jnp.float32)                    # (B, 3)

    dtN = jnp.diff(x[:, :, 0], axis=1)                           # (B, SIZE-1)
    pN = x[:, :, 1:4]                                            # (B, SIZE, 3)

    # --- Jacobian from static sparsity pattern (no per-batch scatters) ---------------
    J = _J_CONST[None] + jnp.einsum('bk,krn->brn', dtN, _J_DT_BASIS)   # (B, NRES, NVAR)

    # --- residual offset c -------------------------------------------------------------
    g = jnp.asarray(GRAVITY)
    c_vw = jnp.concatenate(
        [dtN[:, :, None] * g[None, None, :],                     # v rows: dt * gravity
         jnp.zeros((B, SIZE - 1, 3), jnp.float32)],              # w rows: 0
        axis=-1).reshape(B, 6 * (SIZE - 1))
    c = jnp.concatenate(
        [-pN.reshape(B, 3 * SIZE),                               # position priors
         jnp.zeros((B, 3 * (SIZE - 1)), jnp.float32),            # position dynamics
         c_vw,                                                   # v/w dynamics
         -w0_flat], axis=-1)                                     # w0 prior   -> (B, NRES)

    # --- normal equations at the true 72x72 size + batched Cholesky solve -------------
    Jw = _WDIAG[None, :, None] * J                               # (B, NRES, NVAR)
    G = jnp.einsum('brn,brm->bnm', Jw, Jw)                       # J^T W^2 J
    g0 = jnp.einsum('brn,br->bn', Jw, _WDIAG[None, :] * c)       # J^T W^2 c
    A = G + DAMPING * jnp.eye(NVAR, dtype=jnp.float32)[None]     # damped normal matrix

    def _fuse(Ab, Gb, g0b):
        cf = jax.scipy.linalg.cho_factor(Ab)
        AinvG = jax.scipy.linalg.cho_solve(cf, Gb)                    # Ainv @ G
        Ainvg0 = jax.scipy.linalg.cho_solve(cf, g0b[:, None])[:, 0]   # Ainv @ g0
        M = jnp.eye(NVAR, dtype=jnp.float32) - AinvG.T                # I - G @ Ainv
        return M, -Ainvg0

    M, bvec = jax.vmap(_fuse)(A, G, g0)                          # (B,NVAR,NVAR), (B,NVAR)

    # --- initial solution: p_i = measured p, v_i ~ U[0,1) (deterministic), w_i = w0 ----
    v_init = jax.random.uniform(jax.random.PRNGKey(1), (B, SIZE, 3), dtype=jnp.float32)
    theta0 = jnp.concatenate(
        [pN, v_init, jnp.broadcast_to(w0_flat[:, None, :], (B, SIZE, 3))],
        axis=-1).reshape(B, NVAR)

    # --- pad to lane-dense 128 width; M to bf16 (theta/b stay f32) ---------------------
    # Padded lanes: M rows/cols and b are 0 and theta0 is 0, so they stay exactly 0.
    M_p = jnp.pad(M, ((0, 0), (0, NP - NVAR), (0, NP - NVAR))).astype(jnp.bfloat16)
    b_p = jnp.pad(bvec, ((0, 0), (0, NP - NVAR)))[:, None, :]    # (B, 1, NP) f32
    th0_p = jnp.pad(theta0, ((0, 0), (0, NP - NVAR)))[:, None, :]

    # --- batch blocking: cap bt at ceil(B/2) so the parallel grid has >= 2 steps -------
    bt = max(1, min(BT_CAP, pl.cdiv(B, 2)))
    nb = pl.cdiv(B, bt)
    b_pad = nb * bt
    if b_pad != B:
        pad_b = lambda a: jnp.pad(a, [(0, b_pad - B)] + [(0, 0)] * (a.ndim - 1))
        M_p, b_p, th0_p = map(pad_b, (M_p, b_p, th0_p))

    theta_opt = pl.pallas_call(
        _lm_kernel,
        out_shape=jax.ShapeDtypeStruct((b_pad, 1, NP), jnp.float32),
        grid=(nb,),
        in_specs=[
            pl.BlockSpec((bt, NP, NP), lambda i: (i, 0, 0)),     # M   (bf16)
            pl.BlockSpec((bt, 1, NP), lambda i: (i, 0, 0)),      # b
            pl.BlockSpec((bt, 1, NP), lambda i: (i, 0, 0)),      # theta0
        ],
        out_specs=pl.BlockSpec((bt, 1, NP), lambda i: (i, 0, 0)),
        compiler_params=pltpu.CompilerParams(dimension_semantics=("parallel",)),
    )(M_p, b_p, th0_p)

    theta_opt = theta_opt[:B, 0, :]                              # (B, NP)
    p0 = theta_opt[:, 0:3][:, None, :]                           # (B, 1, 3)
    v0 = theta_opt[:, 3:6][:, None, :]                           # (B, 1, 3)
    # The torch module returns the input w0 prior (not the optimized w0) -- mirrored here.
    return p0, v0, w0_flat[:, None, :]


if __name__ == "__main__":
    key = jax.random.PRNGKey(0)
    k_pos, k_w0 = jax.random.split(key)
    B = 2
    # strictly increasing timestamps (col 0) + random positions (cols 1:4)
    t = jnp.broadcast_to(jnp.arange(SIZE, dtype=jnp.float32)[None, :] * 0.02, (B, SIZE))
    pos = jax.random.normal(k_pos, (B, SIZE, 3), dtype=jnp.float32)
    x = jnp.concatenate([t[..., None], pos], axis=-1)            # (B, SIZE, 4)
    w0_in = 0.1 * jax.random.normal(k_w0, (B, 1, 3), dtype=jnp.float32)

    p0, v0, w0_out = optim_layer_forward(x, w0_in)
    jax.block_until_ready((p0, v0, w0_out))
    assert p0.shape == (B, 1, 3) and v0.shape == (B, 1, 3) and w0_out.shape == (B, 1, 3)
    assert bool(jnp.all(jnp.isfinite(p0))) and bool(jnp.all(jnp.isfinite(v0)))
    print("KERNEL_OK")
</pallas_src>

<mosaic_0001>
module attributes {stable_mosaic.version = 11 : i64} {
  func.func @_lm_kernel(%arg0: i32, %arg1: memref<1x128x128xbf16, #tpu.memory_space<vmem>>, %arg2: memref<1x1x128xf32, #tpu.memory_space<vmem>>, %arg3: memref<1x1x128xf32, #tpu.memory_space<vmem>>, %arg4: memref<1x1x128xf32, #tpu.memory_space<vmem>>) attributes {dimension_semantics = [#tpu.dimension_semantics<parallel>], iteration_bounds = array<i64: 2>, scalar_prefetch = 0 : i64, scratch_operands = 0 : i64, tpu.core_type = #tpu.core_type<tc>, window_params = [{transform_indices = @transform_0, window_bounds = array<i64: 1, 128, 128>}, {transform_indices = @transform_1, window_bounds = array<i64: 1, 1, 128>}, {transform_indices = @transform_2, window_bounds = array<i64: 1, 1, 128>}, {transform_indices = @transform_3, window_bounds = array<i64: 1, 1, 128>}]} {
    %c0 = arith.constant 0 : index
    %c0_0 = arith.constant 0 : index
    %c0_1 = arith.constant 0 : index
    %0 = vector.load %arg1[%c0, %c0_0, %c0_1] : memref<1x128x128xbf16, #tpu.memory_space<vmem>>, vector<1x128x128xbf16>
    %c0_2 = arith.constant 0 : index
    %c0_3 = arith.constant 0 : index
    %c0_4 = arith.constant 0 : index
    %1 = vector.load %arg2[%c0_2, %c0_3, %c0_4] : memref<1x1x128xf32, #tpu.memory_space<vmem>>, vector<1x1x128xf32>
    %c0_5 = arith.constant 0 : index
    %c0_6 = arith.constant 0 : index
    %c0_7 = arith.constant 0 : index
    %2 = vector.load %arg3[%c0_5, %c0_6, %c0_7] : memref<1x1x128xf32, #tpu.memory_space<vmem>>, vector<1x1x128xf32>
    %c0_i32 = arith.constant 0 : i32
    %3 = arith.truncf %2 : vector<1x1x128xf32> to vector<1x1x128xbf16>
    "tpu.trace_start"() <{level = 10 : i32, message = "bon,bnm->bom"}> : () -> ()
    %cst = arith.constant dense<0.000000e+00> : vector<1x1x128xf32>
    %4 = tpu.matmul %3, %0, %cst {dimension_numbers = #tpu.dot_dimension_numbers<[2], [1], [1], [2], [0, 0, 0, 1, 1, 2], [0], [0]>} : vector<1x1x128xbf16>, vector<1x128x128xbf16>, vector<1x1x128xf32> -> vector<1x1x128xf32>
    "tpu.trace_stop"() : () -> ()
    %5 = arith.addf %4, %1 : vector<1x1x128xf32>
    %c1_i32 = arith.constant 1 : i32
    %6 = arith.truncf %5 : vector<1x1x128xf32> to vector<1x1x128xbf16>
    "tpu.trace_start"() <{level = 10 : i32, message = "bon,bnm->bom"}> : () -> ()
    %cst_8 = arith.constant dense<0.000000e+00> : vector<1x1x128xf32>
    %7 = tpu.matmul %6, %0, %cst_8 {dimension_numbers = #tpu.dot_dimension_numbers<[2], [1], [1], [2], [0, 0, 0, 1, 1, 2], [0], [0]>} : vector<1x1x128xbf16>, vector<1x128x128xbf16>, vector<1x1x128xf32> -> vector<1x1x128xf32>
    "tpu.trace_stop"() : () -> ()
    %8 = arith.addf %7, %1 : vector<1x1x128xf32>
    %c2_i32 = arith.constant 2 : i32
    %9 = arith.truncf %8 : vector<1x1x128xf32> to vector<1x1x128xbf16>
    "tpu.trace_start"() <{level = 10 : i32, message = "bon,bnm->bom"}> : () -> ()
    %cst_9 = arith.constant dense<0.000000e+00> : vector<1x1x128xf32>
    %10 = tpu.matmul %9, %0, %cst_9 {dimension_numbers = #tpu.dot_dimension_numbers<[2], [1], [1], [2], [0, 0, 0, 1, 1, 2], [0], [0]>} : vector<1x1x128xbf16>, vector<1x128x128xbf16>, vector<1x1x128xf32> -> vector<1x1x128xf32>
    "tpu.trace_stop"() : () -> ()
    %11 = arith.addf %10, %1 : vector<1x1x128xf32>
    %c3_i32 = arith.constant 3 : i32
    %12 = arith.truncf %11 : vector<1x1x128xf32> to vector<1x1x128xbf16>
    "tpu.trace_start"() <{level = 10 : i32, message = "bon,bnm->bom"}> : () -> ()
    %cst_10 = arith.constant dense<0.000000e+00> : vector<1x1x128xf32>
    %13 = tpu.matmul %12, %0, %cst_10 {dimension_numbers = #tpu.dot_dimension_numbers<[2], [1], [1], [2], [0, 0, 0, 1, 1, 2], [0], [0]>} : vector<1x1x128xbf16>, vector<1x128x128xbf16>, vector<1x1x128xf32> -> vector<1x1x128xf32>
    "tpu.trace_stop"() : () -> ()
    %14 = arith.addf %13, %1 : vector<1x1x128xf32>
    %c4_i32 = arith.constant 4 : i32
    %15 = arith.truncf %14 : vector<1x1x128xf32> to vector<1x1x128xbf16>
    "tpu.trace_start"() <{level = 10 : i32, message = "bon,bnm->bom"}> : () -> ()
    %cst_11 = arith.constant dense<0.000000e+00> : vector<1x1x128xf32>
    %16 = tpu.matmul %15, %0, %cst_11 {dimension_numbers = #tpu.dot_dimension_numbers<[2], [1], [1], [2], [0, 0, 0, 1, 1, 2], [0], [0]>} : vector<1x1x128xbf16>, vector<1x128x128xbf16>, vector<1x1x128xf32> -> vector<1x1x128xf32>
    "tpu.trace_stop"() : () -> ()
    %17 = arith.addf %16, %1 : vector<1x1x128xf32>
    %c5_i32 = arith.constant 5 : i32
    %18 = arith.truncf %17 : vector<1x1x128xf32> to vector<1x1x128xbf16>
    "tpu.trace_start"() <{level = 10 : i32, message = "bon,bnm->bom"}> : () -> ()
    %cst_12 = arith.constant dense<0.000000e+00> : vector<1x1x128xf32>
    %19 = tpu.matmul %18, %0, %cst_12 {dimension_numbers = #tpu.dot_dimension_numbers<[2], [1], [1], [2], [0, 0, 0, 1, 1, 2], [0], [0]>} : vector<1x1x128xbf16>, vector<1x128x128xbf16>, vector<1x1x128xf32> -> vector<1x1x128xf32>
    "tpu.trace_stop"() : () -> ()
    %20 = arith.addf %19, %1 : vector<1x1x128xf32>
    %c6_i32 = arith.constant 6 : i32
    %21 = arith.truncf %20 : vector<1x1x128xf32> to vector<1x1x128xbf16>
    "tpu.trace_start"() <{level = 10 : i32, message = "bon,bnm->bom"}> : () -> ()
    %cst_13 = arith.constant dense<0.000000e+00> : vector<1x1x128xf32>
    %22 = tpu.matmul %21, %0, %cst_13 {dimension_numbers = #tpu.dot_dimension_numbers<[2], [1], [1], [2], [0, 0, 0, 1, 1, 2], [0], [0]>} : vector<1x1x128xbf16>, vector<1x128x128xbf16>, vector<1x1x128xf32> -> vector<1x1x128xf32>
    "tpu.trace_stop"() : () -> ()
    %23 = arith.addf %22, %1 : vector<1x1x128xf32>
    %c7_i32 = arith.constant 7 : i32
    %24 = arith.truncf %23 : vector<1x1x128xf32> to vector<1x1x128xbf16>
    "tpu.trace_start"() <{level = 10 : i32, message = "bon,bnm->bom"}> : () -> ()
    %cst_14 = arith.constant dense<0.000000e+00> : vector<1x1x128xf32>
    %25 = tpu.matmul %24, %0, %cst_14 {dimension_numbers = #tpu.dot_dimension_numbers<[2], [1], [1], [2], [0, 0, 0, 1, 1, 2], [0], [0]>} : vector<1x1x128xbf16>, vector<1x128x128xbf16>, vector<1x1x128xf32> -> vector<1x1x128xf32>
    "tpu.trace_stop"() : () -> ()
    %26 = arith.addf %25, %1 : vector<1x1x128xf32>
    %c8_i32 = arith.constant 8 : i32
    %27 = arith.truncf %26 : vector<1x1x128xf32> to vector<1x1x128xbf16>
    "tpu.trace_start"() <{level = 10 : i32, message = "bon,bnm->bom"}> : () -> ()
    %cst_15 = arith.constant dense<0.000000e+00> : vector<1x1x128xf32>
    %28 = tpu.matmul %27, %0, %cst_15 {dimension_numbers = #tpu.dot_dimension_numbers<[2], [1], [1], [2], [0, 0, 0, 1, 1, 2], [0], [0]>} : vector<1x1x128xbf16>, vector<1x128x128xbf16>, vector<1x1x128xf32> -> vector<1x1x128xf32>
    "tpu.trace_stop"() : () -> ()
    %29 = arith.addf %28, %1 : vector<1x1x128xf32>
    %c9_i32 = arith.constant 9 : i32
    %30 = arith.truncf %29 : vector<1x1x128xf32> to vector<1x1x128xbf16>
    "tpu.trace_start"() <{level = 10 : i32, message = "bon,bnm->bom"}> : () -> ()
    %cst_16 = arith.constant dense<0.000000e+00> : vector<1x1x128xf32>
    %31 = tpu.matmul %30, %0, %cst_16 {dimension_numbers = #tpu.dot_dimension_numbers<[2], [1], [1], [2], [0, 0, 0, 1, 1, 2], [0], [0]>} : vector<1x1x128xbf16>, vector<1x128x128xbf16>, vector<1x1x128xf32> -> vector<1x1x128xf32>
    "tpu.trace_stop"() : () -> ()
    %32 = arith.addf %31, %1 : vector<1x1x128xf32>
    %c0_17 = arith.constant 0 : index
    %c0_18 = arith.constant 0 : index
    %c0_19 = arith.constant 0 : index
    %33 = vector.load %arg4[%c0_17, %c0_18, %c0_19] : memref<1x1x128xf32, #tpu.memory_space<vmem>>, vector<1x1x128xf32>
    tpu.vector_store %arg4[%c0_17, %c0_18, %c0_19], %32 {strides = array<i32>} : memref<1x1x128xf32, #tpu.memory_space<vmem>>, vector<1x1x128xf32>,
    return
  }
  func.func @transform_0(%arg0: i32) -> (i32, i32, i32) {
    %c0_i32 = arith.constant 0 : i32
    %c0_i32_0 = arith.constant 0 : i32
    %c0_i32_1 = arith.constant 0 : i32
    return %arg0, %c0_i32, %c0_i32_0 : i32, i32, i32
  }
  func.func @transform_1(%arg0: i32) -> (i32, i32, i32) {
    %c0_i32 = arith.constant 0 : i32
    %c0_i32_0 = arith.constant 0 : i32
    %c0_i32_1 = arith.constant 0 : i32
    return %arg0, %c0_i32, %c0_i32_0 : i32, i32, i32
  }
  func.func @transform_2(%arg0: i32) -> (i32, i32, i32) {
    %c0_i32 = arith.constant 0 : i32
    %c0_i32_0 = arith.constant 0 : i32
    %c0_i32_1 = arith.constant 0 : i32
    return %arg0, %c0_i32, %c0_i32_0 : i32, i32, i32
  }
  func.func @transform_3(%arg0: i32) -> (i32, i32, i32) {
    %c0_i32 = arith.constant 0 : i32
    %c0_i32_0 = arith.constant 0 : i32
    %c0_i32_1 = arith.constant 0 : i32
    return %arg0, %c0_i32, %c0_i32_0 : i32, i32, i32
  }
}

</mosaic_0001>

<llo_original>
// kernel: tpu_custom_call.1
$region0: #{tpu_custom_call.1}
  #allocation0 [shape = 'u32[]', space=smem, size = 0x4, offset = 0x4, fixed_abs, tag = 'smem constant byte address 0x4 - core index']
  #allocation1 [shape = 'u32[144,128]{1,0:T(1,128)}', space=vmem, size = 0x12000, scoped, tag = 'internal scratch']
  %s0 = inlined_call_operand.hbm [shape: bf16[2,128,128], index: 0, kind: input, shape index: {}]
  %s1 = inlined_call_operand.hbm [shape: f32[2,1,128], index: 1, kind: input, shape index: {}]
  %s2 = inlined_call_operand.vmem [shape: f32[2,1,128], index: 2, kind: input, shape index: {}]
  %s3 = inlined_call_operand.hbm [shape: f32[2,1,128], index: 3, kind: output, shape index: {}]
  %s4 = sld [smem:[#allocation0]]
  $region53: #{tpu_custom_call.1} parent=0
    _
  %s6 = ssub.s32 1, %s4
  %s7 = scalar_select 0, %s6, %s4
  $region1: #{tpu_custom_call.1} parent=0
    #allocation2 [shape = 'u8[65536]{0}', space=vmem, size = 0x10000, scoped, tag = 'input window, operand 0']
    #allocation3 [shape = 's32[2]{0}', space=sflag, size = 0x8, scoped, tag = 'scoped memory for tpu_custom_call.1']
    #allocation4 [shape = 's32[2]{0}', space=sflag, size = 0x8, scoped, tag = 'scoped memory for tpu_custom_call.1']
    #allocation5 [shape = 'u8[1024]{0}', space=vmem, size = 0x400, scoped, tag = 'input window, operand 1']
    #allocation6 [shape = 's32[2]{0}', space=sflag, size = 0x8, scoped, tag = 'scoped memory for tpu_custom_call.1']
    #allocation7 [shape = 'u8[1024]{0}', space=vmem, size = 0x400, scoped, tag = 'output window, operand 0']
    %8 = vsyncpa [#allocation3], 0
    %s9 = scalar_lea.sflag [#allocation3], 1
    %10 = vsyncpa %s9, 0
    %11 = vsyncpa [#allocation6], 0
    %s12 = scalar_lea.sflag [#allocation6], 1
    %13 = vsyncpa %s12, 0
    %14 = vsyncpa [#allocation4], 0
    %s15 = scalar_lea.sflag [#allocation4], 1
    %16 = vsyncpa %s15, 0
    loop: start=0, step=1, limit=4
    $region2: #{tpu_custom_call.1} parent=1 // loop_pre_header
      _
    $region3: #{tpu_custom_call.1} parent=1 // loop_header
      %s18 = sphi 0, %s22
      %p19 = scmp.ge.s32.totalorder %s18, 4
      %s28 = sphi 0, %s30
      %s31 = sphi 0, %s28
      %s32 = sphi 0, %s31
      %s48 = sphi 0, %s32
      %s54 = sphi 0, %s56
      %s57 = sphi 0, %s54
      %s58 = sphi 0, %s57
      %s74 = sphi 0, %s58
      %s80 = sphi 0, %s82
      %s83 = sphi 0, %s80
      %s84 = sphi 0, %s83
      %s100 = sphi 0, %s84
      %s106 = sphi 0, %s108
      %s109 = sphi 0, %s106
      %s110 = sphi 0, %s109
      %s126 = sphi 0, %s110
    $region4: #{tpu_custom_call.1} parent=1 // loop_header_branch
      %21 = sbr.rel (%p19) target = $region8
    $region5: #{tpu_custom_call.1} parent=1 // loop_body
      %s23 = ssub.s32 %s18, 1
      %s24 = ssub.s32 %s18, 2
      %s25 = sadd.s32 %s18, 1
      %s26 = ssub.s32 %s18, %s25
      %p27 = scmp.eq.s32.totalorder %s26, 0
      %s29 = sadd.s32 %s28, 1
      %s30 = scalar_select %p27, %s28, %s29
      %p33 = pneg %p27
      %p34 = scmp.eq.s32.totalorder %s18, 1
      %p35 = por %p33, %p34
      %p36 = scmp.ne.s32.totalorder %s28, %s31
      %p37 = scmp.eq.s32.totalorder %s18, 0
      %p38 = por %p36, %p37
      %p39 = scmp.ne.s32.totalorder %s28, %s31
      %p40 = scmp.eq.s32.totalorder %s23, 1
      %p41 = por %p39, %p40
      %p42 = scmp.ne.s32.totalorder %s31, %s32
      %p43 = scmp.eq.s32.totalorder %s23, 0
      %p44 = por %p42, %p43
      %p45 = scmp.ne.s32.totalorder %s31, %s32
      %p46 = scmp.eq.s32.totalorder %s24, 1
      %p47 = por %p45, %p46
      %p49 = scmp.ne.s32.totalorder %s32, %s48
      %p50 = scmp.eq.s32.totalorder %s24, 0
      %p51 = por %p49, %p50
      %s52 = ssub.s32 %s18, %s25
      %p53 = scmp.eq.s32.totalorder %s52, 0
      %s55 = sadd.s32 %s54, 1
      %s56 = scalar_select %p53, %s54, %s55
      %p59 = pneg %p53
      %p60 = scmp.eq.s32.totalorder %s18, 1
      %p61 = por %p59, %p60
      %p62 = scmp.ne.s32.totalorder %s54, %s57
      %p63 = scmp.eq.s32.totalorder %s18, 0
      %p64 = por %p62, %p63
      %p65 = scmp.ne.s32.totalorder %s54, %s57
      %p66 = scmp.eq.s32.totalorder %s23, 1
      %p67 = por %p65, %p66
      %p68 = scmp.ne.s32.totalorder %s57, %s58
      %p69 = scmp.eq.s32.totalorder %s23, 0
      %p70 = por %p68, %p69
      %p71 = scmp.ne.s32.totalorder %s57, %s58
      %p72 = scmp.eq.s32.totalorder %s24, 1
      %p73 = por %p71, %p72
      %p75 = scmp.ne.s32.totalorder %s58, %s74
      %p76 = scmp.eq.s32.totalorder %s24, 0
      %p77 = por %p75, %p76
      %s78 = ssub.s32 %s18, %s25
      %p79 = scmp.eq.s32.totalorder %s78, 0
      %s81 = sadd.s32 %s80, 1
      %s82 = scalar_select %p79, %s80, %s81
      %p85 = pneg %p79
      %p86 = scmp.eq.s32.totalorder %s18, 1
      %p87 = por %p85, %p86
      %p88 = scmp.ne.s32.totalorder %s80, %s83
      %p89 = scmp.eq.s32.totalorder %s18, 0
      %p90 = por %p88, %p89
      %p91 = scmp.ne.s32.totalorder %s80, %s83
      %p92 = scmp.eq.s32.totalorder %s23, 1
      %p93 = por %p91, %p92
      %p94 = scmp.ne.s32.totalorder %s83, %s84
      %p95 = scmp.eq.s32.totalorder %s23, 0
      %p96 = por %p94, %p95
      %p97 = scmp.ne.s32.totalorder %s83, %s84
      %p98 = scmp.eq.s32.totalorder %s24, 1
      %p99 = por %p97, %p98
      %p101 = scmp.ne.s32.totalorder %s84, %s100
      %p102 = scmp.eq.s32.totalorder %s24, 0
      %p103 = por %p101, %p102
      %s104 = ssub.s32 %s18, %s25
      %p105 = scmp.eq.s32.totalorder %s104, 0
      %s107 = sadd.s32 %s106, 1
      %s108 = scalar_select %p105, %s106, %s107
      %p111 = pneg %p105
      %p112 = scmp.eq.s32.totalorder %s18, 1
      %p113 = por %p111, %p112
      %p114 = scmp.ne.s32.totalorder %s106, %s109
      %p115 = scmp.eq.s32.totalorder %s18, 0
      %p116 = por %p114, %p115
      %p117 = scmp.ne.s32.totalorder %s106, %s109
      %p118 = scmp.eq.s32.totalorder %s23, 1
      %p119 = por %p117, %p118
      %p120 = scmp.ne.s32.totalorder %s109, %s110
      %p121 = scmp.eq.s32.totalorder %s23, 0
      %p122 = por %p120, %p121
      %p123 = scmp.ne.s32.totalorder %s109, %s110
      %p124 = scmp.eq.s32.totalorder %s24, 1
      %p125 = por %p123, %p124
      %p127 = scmp.ne.s32.totalorder %s110, %s126
      %p128 = scmp.eq.s32.totalorder %s24, 0
      %p129 = por %p127, %p128
      %p130 = scmp.le.s32.totalorder 1, %s18
      %p131 = scmp.lt.s32.totalorder %s18, 3
      %p132 = pnand %p130, %p131
      %p133 = pneg %p132
      // Predicated region
      $region9: #{tpu_custom_call.1} parent=5 // pred_check
        _
      $region10: #{tpu_custom_call.1} parent=5 // pred_check_branch
        %135 = sbr.rel (%p132) target = $region12
      $region11: #{tpu_custom_call.1} parent=5 // pred_region
        %s136 = ssub.s32 %s18, 1
      $region12: #{tpu_custom_call.1} parent=5 // pred_fallthru
        _
      %p137 = scmp.lt.s32.totalorder %s18, 2
      // Predicated region
      $region13: #{tpu_custom_call.1} parent=5 // pred_check
        %p138 = pneg %p137
      $region14: #{tpu_custom_call.1} parent=5 // pred_check_branch
        %140 = sbr.rel (%p138) target = $region16
      $region15: #{tpu_custom_call.1} parent=5 // pred_region
        // Predicated region
        $region17: #{tpu_custom_call.1} parent=15 // pred_check
          %p141 = pneg %p38
        $region18: #{tpu_custom_call.1} parent=15 // pred_check_branch
          %143 = sbr.rel (%p141) target = $region20
        $region19: #{tpu_custom_call.1} parent=15 // pred_region
          %s144 = sand.u32 %s28, 1
          %s145 = scalar_lea.sflag [#allocation3], %s144
          %s146 = sand.u32 %s28, 1
          %s147 = smul.addr %s146, 64
          %s148 = scalar_lea.vmem [#allocation2], %s147
          %s150 = ssub.s32 1024, 1024
          %151 = vsyncadd %s145, %s150
          %s152 = smul.addr %s18, 16
          %s153 = smul.addr %s152, 64
          %s154 = scalar_lea.hbm %s0, %s153
          %s155 = sshll.u32 %s148, 4
          %s156 = int_to_ptr.vmem [resolvable:$true] %s155
          %161 = dma.hbm_to_vmem [thread:$0]  %s154, 1024, %s156, %s145, 64, 64, 4
        $region20: #{tpu_custom_call.1} parent=15 // pred_fallthru
          _
        // Predicated region
        $region21: #{tpu_custom_call.1} parent=15 // pred_check
          %p162 = pneg %p64
        $region22: #{tpu_custom_call.1} parent=15 // pred_check_branch
          %164 = sbr.rel (%p162) target = $region24
        $region23: #{tpu_custom_call.1} parent=15 // pred_region
          %s165 = sand.u32 %s54, 1
          %s166 = scalar_lea.sflag [#allocation6], %s165
          %s167 = sand.u32 %s54, 1
          %s168 = scalar_lea.vmem [#allocation5], %s167
          %s170 = ssub.s32 16, 16
          %171 = vsyncadd %s166, %s170
          %s172 = smul.addr %s18, 16
          %s173 = scalar_lea.hbm %s1, %s172
          %s175 = sshll.u32 %s168, 4
          %s176 = int_to_ptr.vmem [resolvable:$true] %s175
          %178 = dma.hbm_to_vmem [thread:$0]  %s173, 16, %s176, %s166
        $region24: #{tpu_custom_call.1} parent=15 // pred_fallthru
          _
        // Predicated region
        $region25: #{tpu_custom_call.1} parent=15 // pred_check
          %p179 = pneg %p90
        $region26: #{tpu_custom_call.1} parent=15 // pred_check_branch
          %181 = sbr.rel (%p179) target = $region28
        $region27: #{tpu_custom_call.1} parent=15 // pred_region
          %p182 = scmp.lt.s32.totalorder %s18, 1
          %s183 = scalar_select %p182, %s18, 1
          %s184 = scalar_lea.vmem %s2, %s183
        $region28: #{tpu_custom_call.1} parent=15 // pred_fallthru
          _
      $region16: #{tpu_custom_call.1} parent=5 // pred_fallthru
        _
      %p185 = scmp.le.s32.totalorder 1, %s18
      %p186 = scmp.lt.s32.totalorder %s18, 3
      %p187 = pnand %p185, %p186
      %p188 = pneg %p187
      // Predicated region
      $region29: #{tpu_custom_call.1} parent=5 // pred_check
        _
      $region30: #{tpu_custom_call.1} parent=5 // pred_check_branch
        %190 = sbr.rel (%p187) target = $region32
      $region31: #{tpu_custom_call.1} parent=5 // pred_region
        %s191 = ssub.s32 %s18, 1
        %s192 = sand.u32 %s31, 1
        %s193 = scalar_lea.sflag [#allocation3], %s192
        %s194 = sand.u32 %s31, 1
        %s195 = smul.addr %s194, 64
        %s196 = scalar_lea.vmem [#allocation2], %s195
        // Predicated region
        $region33: #{tpu_custom_call.1} parent=31 // pred_check
          %p197 = pneg %p44
        $region34: #{tpu_custom_call.1} parent=31 // pred_check_branch
          %199 = sbr.rel (%p197) target = $region36
        $region35: #{tpu_custom_call.1} parent=31 // pred_region
          %200 = dma.done %s193, 1024
        $region36: #{tpu_custom_call.1} parent=31 // pred_fallthru
          _
        %s201 = sand.u32 %s57, 1
        %s202 = scalar_lea.sflag [#allocation6], %s201
        %s203 = sand.u32 %s57, 1
        %s204 = scalar_lea.vmem [#allocation5], %s203
        // Predicated region
        $region37: #{tpu_custom_call.1} parent=31 // pred_check
          %p205 = pneg %p70
        $region38: #{tpu_custom_call.1} parent=31 // pred_check_branch
          %207 = sbr.rel (%p205) target = $region40
        $region39: #{tpu_custom_call.1} parent=31 // pred_region
          %208 = dma.done %s202, 16
        $region40: #{tpu_custom_call.1} parent=31 // pred_fallthru
          _
        %s209 = sand.u32 %s31, 1
        %s210 = scalar_lea.sflag [#allocation3], %s209
        %s211 = sand.u32 %s31, 1
        %s212 = smul.addr %s211, 64
        %s213 = scalar_lea.vmem [#allocation2], %s212
        %p214 = pneg %p44
        %p215 = pneg %p41
        %s216 = sand.u32 %s57, 1
        %s217 = scalar_lea.sflag [#allocation6], %s216
        %s218 = sand.u32 %s57, 1
        %s219 = scalar_lea.vmem [#allocation5], %s218
        %p220 = pneg %p70
        %p221 = pneg %p67
        %p222 = scmp.lt.s32.totalorder %s23, 1
        %s223 = scalar_select %p222, %s23, 1
        %s224 = scalar_lea.vmem %s2, %s223
        %p225 = pneg %p96
        %p226 = pneg %p93
        %p227 = pneg %p122
        %p228 = pneg %p119
        %s229 = sand.u32 %s109, 1
        %s230 = scalar_lea.sflag [#allocation4], %s229
        %s231 = sand.u32 %s109, 1
        %s232 = scalar_lea.vmem [#allocation7], %s231
        %p233 = scmp.lt.s32.totalorder %s23, 1
        %s234 = scalar_select %p233, %s23, 1
        %s235 = scalar_lea.vmem %s2, %s234
        %v237 = vld [vmem:[%s196] sm:$0xf]
        %v238 = vld [vmem:[%s196 + $0x4] sm:$0xf]
        %v239 = vld [vmem:[%s196 + $0x8] sm:$0xf]
        %v240 = vld [vmem:[%s196 + $0xc] sm:$0xf]
        %v241 = vld [vmem:[%s196 + $0x10] sm:$0xf]
        %v242 = vld [vmem:[%s196 + $0x14] sm:$0xf]
        %v243 = vld [vmem:[%s196 + $0x18] sm:$0xf]
        %v244 = vld [vmem:[%s196 + $0x1c] sm:$0xf]
        %v245 = vld [vmem:[%s196 + $0x20] sm:$0xf]
        %v246 = vld [vmem:[%s196 + $0x24] sm:$0xf]
        %v247 = vld [vmem:[%s196 + $0x28] sm:$0xf]
        %v248 = vld [vmem:[%s196 + $0x2c] sm:$0xf]
        %v249 = vld [vmem:[%s196 + $0x30] sm:$0xf]
        %v250 = vld [vmem:[%s196 + $0x34] sm:$0xf]
        %v251 = vld [vmem:[%s196 + $0x38] sm:$0xf]
        %v252 = vld [vmem:[%s196 + $0x3c] sm:$0xf]
        %v253 = vld [vmem:[%s204] sm:$0x1]
        %v254 = vld [vmem:[%s235] sm:$0x1]
        %v255 = vpack.c.bf16 %v254, %v254
        %v272 = vunpack.c.l.b16 %v237
        %v273 = vunpack.c.l.b16 %v238
        %v274 = vunpack.c.l.b16 %v239
        %v275 = vunpack.c.l.b16 %v240
        %v276 = vunpack.c.l.b16 %v241
        %v277 = vunpack.c.l.b16 %v242
        %v278 = vunpack.c.l.b16 %v243
        %v279 = vunpack.c.l.b16 %v244
        %v280 = vunpack.c.l.b16 %v245
        %v281 = vunpack.c.l.b16 %v246
        %v282 = vunpack.c.l.b16 %v247
        %v283 = vunpack.c.l.b16 %v248
        %v284 = vunpack.c.l.b16 %v249
        %v285 = vunpack.c.l.b16 %v250
        %v286 = vunpack.c.l.b16 %v251
        %v287 = vunpack.c.l.b16 %v252
        %v288 = vpack.c.b16 %v273, %v272
        %v289 = vpack.c.b16 %v275, %v274
        %v290 = vpack.c.b16 %v277, %v276
        %v291 = vpack.c.b16 %v279, %v278
        %v292 = vpack.c.b16 %v281, %v280
        %v293 = vpack.c.b16 %v283, %v282
        %v294 = vpack.c.b16 %v285, %v284
        %v295 = vpack.c.b16 %v287, %v286
        %304 = vmatprep.subr.bf16.mxu0 0
        %305 = vmatpush1.bf16.msra.mxu0 %v295
        %306 = vmatprep.subr.bf16.mxu0 0
        %307 = vmatpush1.bf16.msra.mxu0 %v294
        %308 = vmatprep.subr.bf16.mxu0 0
        %309 = vmatpush1.bf16.msra.mxu0 %v293
        %310 = vmatprep.subr.bf16.mxu0 0
        %311 = vmatpush1.bf16.msra.mxu0 %v292
        %312 = vmatprep.subr.bf16.mxu0 0
        %313 = vmatpush1.bf16.msra.mxu0 %v291
        %314 = vmatprep.subr.bf16.mxu0 0
        %315 = vmatpush1.bf16.msra.mxu0 %v290
        %316 = vmatprep.subr.bf16.mxu0 0
        %317 = vmatpush1.bf16.msra.mxu0 %v289
        %318 = vmatprep.subr.bf16.mxu0 0
        %319 = vmatpush1.bf16.msra.mxu0 %v288
        %320 = vmatprep.subr.bf16.mxu0 0
        %321 = vmatpush2.bf16.msra.mxu0 0
        %322 = vmatprep.subr.bf16.mxu0 0
        %323 = vmatpush2.bf16.msra.mxu0 0
        %324 = vmatprep.subr.bf16.mxu0 0
        %325 = vmatpush2.bf16.msra.mxu0 0
        %326 = vmatprep.subr.bf16.mxu0 0
        %327 = vmatpush2.bf16.msra.mxu0 0
        %328 = vmatprep.subr.bf16.mxu0 0
        %329 = vmatpush2.bf16.msra.mxu0 0
        %330 = vmatprep.subr.bf16.mxu0 0
        %331 = vmatpush2.bf16.msra.mxu0 0
        %332 = vmatprep.subr.bf16.mxu0 0
        %333 = vmatpush2.bf16.msra.mxu0 0
        %334 = vmatprep.subr.bf16.mxu0 0
        %335 = vmatpush2.bf16.msra.mxu0 0
        %336 = vmatprep.mubr.bf16.mxu0 0
        %337 = vmatmul.mubr.bf16.gmra.mxu0 %v255
        %v338 = vpop.f32.mrf.mxu0
        %v339 = vadd.f32 %v253, %v338
        %v340 = vpop.f32.mrf.mxu0
        %v341 = vpop.f32.mrf.mxu0
        %v342 = vpop.f32.mrf.mxu0
        %343 = vdwg.mxu0
        %v344 = vpack.c.bf16 %v339, %v339
        %345 = vmatprep.subr.bf16.mxu0 0
        %346 = vmatpush1.bf16.msra.mxu0 %v295
        %347 = vmatprep.subr.bf16.mxu0 0
        %348 = vmatpush1.bf16.msra.mxu0 %v294
        %349 = vmatprep.subr.bf16.mxu0 0
        %350 = vmatpush1.bf16.msra.mxu0 %v293
        %351 = vmatprep.subr.bf16.mxu0 0
        %352 = vmatpush1.bf16.msra.mxu0 %v292
        %353 = vmatprep.subr.bf16.mxu0 0
        %354 = vmatpush1.bf16.msra.mxu0 %v291
        %355 = vmatprep.subr.bf16.mxu0 0
        %356 = vmatpush1.bf16.msra.mxu0 %v290
        %357 = vmatprep.subr.bf16.mxu0 0
        %358 = vmatpush1.bf16.msra.mxu0 %v289
        %359 = vmatprep.subr.bf16.mxu0 0
        %360 = vmatpush1.bf16.msra.mxu0 %v288
        %361 = vmatprep.subr.bf16.mxu0 0
        %362 = vmatpush2.bf16.msra.mxu0 0
        %363 = vmatprep.subr.bf16.mxu0 0
        %364 = vmatpush2.bf16.msra.mxu0 0
        %365 = vmatprep.subr.bf16.mxu0 0
        %366 = vmatpush2.bf16.msra.mxu0 0
        %367 = vmatprep.subr.bf16.mxu0 0
        %368 = vmatpush2.bf16.msra.mxu0 0
        %369 = vmatprep.subr.bf16.mxu0 0
        %370 = vmatpush2.bf16.msra.mxu0 0
        %371 = vmatprep.subr.bf16.mxu0 0
        %372 = vmatpush2.bf16.msra.mxu0 0
        %373 = vmatprep.subr.bf16.mxu0 0
        %374 = vmatpush2.bf16.msra.mxu0 0
        %375 = vmatprep.subr.bf16.mxu0 0
        %376 = vmatpush2.bf16.msra.mxu0 0
        %377 = vmatprep.mubr.bf16.mxu0 0
        %378 = vmatmul.mubr.bf16.gmra.mxu0 %v344
        %v379 = vpop.f32.mrf.mxu0
        %v380 = vadd.f32 %v253, %v379
        %v381 = vpop.f32.mrf.mxu0
        %v382 = vpop.f32.mrf.mxu0
        %v383 = vpop.f32.mrf.mxu0
        %384 = vdwg.mxu0
        %v385 = vpack.c.bf16 %v380, %v380
        %386 = vmatprep.subr.bf16.mxu0 0
        %387 = vmatpush1.bf16.msra.mxu0 %v295
        %388 = vmatprep.subr.bf16.mxu0 0
        %389 = vmatpush1.bf16.msra.mxu0 %v294
        %390 = vmatprep.subr.bf16.mxu0 0
        %391 = vmatpush1.bf16.msra.mxu0 %v293
        %392 = vmatprep.subr.bf16.mxu0 0
        %393 = vmatpush1.bf16.msra.mxu0 %v292
        %394 = vmatprep.subr.bf16.mxu0 0
        %395 = vmatpush1.bf16.msra.mxu0 %v291
        %396 = vmatprep.subr.bf16.mxu0 0
        %397 = vmatpush1.bf16.msra.mxu0 %v290
        %398 = vmatprep.subr.bf16.mxu0 0
        %399 = vmatpush1.bf16.msra.mxu0 %v289
        %400 = vmatprep.subr.bf16.mxu0 0
        %401 = vmatpush1.bf16.msra.mxu0 %v288
        %402 = vmatprep.subr.bf16.mxu0 0
        %403 = vmatpush2.bf16.msra.mxu0 0
        %404 = vmatprep.subr.bf16.mxu0 0
        %405 = vmatpush2.bf16.msra.mxu0 0
        %406 = vmatprep.subr.bf16.mxu0 0
        %407 = vmatpush2.bf16.msra.mxu0 0
        %408 = vmatprep.subr.bf16.mxu0 0
        %409 = vmatpush2.bf16.msra.mxu0 0
        %410 = vmatprep.subr.bf16.mxu0 0
        %411 = vmatpush2.bf16.msra.mxu0 0
        %412 = vmatprep.subr.bf16.mxu0 0
        %413 = vmatpush2.bf16.msra.mxu0 0
        %414 = vmatprep.subr.bf16.mxu0 0
        %415 = vmatpush2.bf16.msra.mxu0 0
        %416 = vmatprep.subr.bf16.mxu0 0
        %417 = vmatpush2.bf16.msra.mxu0 0
        %418 = vmatprep.mubr.bf16.mxu0 0
        %419 = vmatmul.mubr.bf16.gmra.mxu0 %v385
        %v420 = vpop.f32.mrf.mxu0
        %v421 = vadd.f32 %v253, %v420
        %v422 = vpop.f32.mrf.mxu0
        %v423 = vpop.f32.mrf.mxu0
        %v424 = vpop.f32.mrf.mxu0
        %425 = vdwg.mxu0
        %v426 = vpack.c.bf16 %v421, %v421
        %427 = vmatprep.subr.bf16.mxu0 0
        %428 = vmatpush1.bf16.msra.mxu0 %v295
        %429 = vmatprep.subr.bf16.mxu0 0
        %430 = vmatpush1.bf16.msra.mxu0 %v294
        %431 = vmatprep.subr.bf16.mxu0 0
        %432 = vmatpush1.bf16.msra.mxu0 %v293
        %433 = vmatprep.subr.bf16.mxu0 0
        %434 = vmatpush1.bf16.msra.mxu0 %v292
        %435 = vmatprep.subr.bf16.mxu0 0
        %436 = vmatpush1.bf16.msra.mxu0 %v291
        %437 = vmatprep.subr.bf16.mxu0 0
        %438 = vmatpush1.bf16.msra.mxu0 %v290
        %439 = vmatprep.subr.bf16.mxu0 0
        %440 = vmatpush1.bf16.msra.mxu0 %v289
        %441 = vmatprep.subr.bf16.mxu0 0
        %442 = vmatpush1.bf16.msra.mxu0 %v288
        %443 = vmatprep.subr.bf16.mxu0 0
        %444 = vmatpush2.bf16.msra.mxu0 0
        %445 = vmatprep.subr.bf16.mxu0 0
        %446 = vmatpush2.bf16.msra.mxu0 0
        %447 = vmatprep.subr.bf16.mxu0 0
        %448 = vmatpush2.bf16.msra.mxu0 0
        %449 = vmatprep.subr.bf16.mxu0 0
        %450 = vmatpush2.bf16.msra.mxu0 0
        %451 = vmatprep.subr.bf16.mxu0 0
        %452 = vmatpush2.bf16.msra.mxu0 0
        %453 = vmatprep.subr.bf16.mxu0 0
        %454 = vmatpush2.bf16.msra.mxu0 0
        %455 = vmatprep.subr.bf16.mxu0 0
        %456 = vmatpush2.bf16.msra.mxu0 0
        %457 = vmatprep.subr.bf16.mxu0 0
        %458 = vmatpush2.bf16.msra.mxu0 0
        %459 = vmatprep.mubr.bf16.mxu0 0
        %460 = vmatmul.mubr.bf16.gmra.mxu0 %v426
        %v461 = vpop.f32.mrf.mxu0
        %v462 = vadd.f32 %v253, %v461
        %v463 = vpop.f32.mrf.mxu0
        %v464 = vpop.f32.mrf.mxu0
        %v465 = vpop.f32.mrf.mxu0
        %466 = vdwg.mxu0
        %v467 = vpack.c.bf16 %v462, %v462
        %468 = vmatprep.subr.bf16.mxu0 0
        %469 = vmatpush1.bf16.msra.mxu0 %v295
        %470 = vmatprep.subr.bf16.mxu0 0
        %471 = vmatpush1.bf16.msra.mxu0 %v294
        %472 = vmatprep.subr.bf16.mxu0 0
        %473 = vmatpush1.bf16.msra.mxu0 %v293
        %474 = vmatprep.subr.bf16.mxu0 0
        %475 = vmatpush1.bf16.msra.mxu0 %v292
        %476 = vmatprep.subr.bf16.mxu0 0
        %477 = vmatpush1.bf16.msra.mxu0 %v291
        %478 = vmatprep.subr.bf16.mxu0 0
        %479 = vmatpush1.bf16.msra.mxu0 %v290
        %480 = vmatprep.subr.bf16.mxu0 0
        %481 = vmatpush1.bf16.msra.mxu0 %v289
        %482 = vmatprep.subr.bf16.mxu0 0
        %483 = vmatpush1.bf16.msra.mxu0 %v288
        %484 = vmatprep.subr.bf16.mxu0 0
        %485 = vmatpush2.bf16.msra.mxu0 0
        %486 = vmatprep.subr.bf16.mxu0 0
        %487 = vmatpush2.bf16.msra.mxu0 0
        %488 = vmatprep.subr.bf16.mxu0 0
        %489 = vmatpush2.bf16.msra.mxu0 0
        %490 = vmatprep.subr.bf16.mxu0 0
        %491 = vmatpush2.bf16.msra.mxu0 0
        %492 = vmatprep.subr.bf16.mxu0 0
        %493 = vmatpush2.bf16.msra.mxu0 0
        %494 = vmatprep.subr.bf16.mxu0 0
        %495 = vmatpush2.bf16.msra.mxu0 0
        %496 = vmatprep.subr.bf16.mxu0 0
        %497 = vmatpush2.bf16.msra.mxu0 0
        %498 = vmatprep.subr.bf16.mxu0 0
        %499 = vmatpush2.bf16.msra.mxu0 0
        %500 = vmatprep.mubr.bf16.mxu0 0
        %501 = vmatmul.mubr.bf16.gmra.mxu0 %v467
        %v502 = vpop.f32.mrf.mxu0
        %v503 = vadd.f32 %v253, %v502
        %v504 = vpop.f32.mrf.mxu0
        %v505 = vpop.f32.mrf.mxu0
        %v506 = vpop.f32.mrf.mxu0
        %507 = vdwg.mxu0
        %v508 = vpack.c.bf16 %v503, %v503
        %509 = vmatprep.subr.bf16.mxu0 0
        %510 = vmatpush1.bf16.msra.mxu0 %v295
        %511 = vmatprep.subr.bf16.mxu0 0
        %512 = vmatpush1.bf16.msra.mxu0 %v294
        %513 = vmatprep.subr.bf16.mxu0 0
        %514 = vmatpush1.bf16.msra.mxu0 %v293
        %515 = vmatprep.subr.bf16.mxu0 0
        %516 = vmatpush1.bf16.msra.mxu0 %v292
        %517 = vmatprep.subr.bf16.mxu0 0
        %518 = vmatpush1.bf16.msra.mxu0 %v291
        %519 = vmatprep.subr.bf16.mxu0 0
        %520 = vmatpush1.bf16.msra.mxu0 %v290
        %521 = vmatprep.subr.bf16.mxu0 0
        %522 = vmatpush1.bf16.msra.mxu0 %v289
        %523 = vmatprep.subr.bf16.mxu0 0
        %524 = vmatpush1.bf16.msra.mxu0 %v288
        %525 = vmatprep.subr.bf16.mxu0 0
        %526 = vmatpush2.bf16.msra.mxu0 0
        %527 = vmatprep.subr.bf16.mxu0 0
        %528 = vmatpush2.bf16.msra.mxu0 0
        %529 = vmatprep.subr.bf16.mxu0 0
        %530 = vmatpush2.bf16.msra.mxu0 0
        %531 = vmatprep.subr.bf16.mxu0 0
        %532 = vmatpush2.bf16.msra.mxu0 0
        %533 = vmatprep.subr.bf16.mxu0 0
        %534 = vmatpush2.bf16.msra.mxu0 0
        %535 = vmatprep.subr.bf16.mxu0 0
        %536 = vmatpush2.bf16.msra.mxu0 0
        %537 = vmatprep.subr.bf16.mxu0 0
        %538 = vmatpush2.bf16.msra.mxu0 0
        %539 = vmatprep.subr.bf16.mxu0 0
        %540 = vmatpush2.bf16.msra.mxu0 0
        %541 = vmatprep.mubr.bf16.mxu0 0
        %542 = vmatmul.mubr.bf16.gmra.mxu0 %v508
        %v543 = vpop.f32.mrf.mxu0
        %v544 = vadd.f32 %v253, %v543
        %v545 = vpop.f32.mrf.mxu0
        %v546 = vpop.f32.mrf.mxu0
        %v547 = vpop.f32.mrf.mxu0
        %548 = vdwg.mxu0
        %v549 = vpack.c.bf16 %v544, %v544
        %550 = vmatprep.subr.bf16.mxu0 0
        %551 = vmatpush1.bf16.msra.mxu0 %v295
        %552 = vmatprep.subr.bf16.mxu0 0
        %553 = vmatpush1.bf16.msra.mxu0 %v294
        %554 = vmatprep.subr.bf16.mxu0 0
        %555 = vmatpush1.bf16.msra.mxu0 %v293
        %556 = vmatprep.subr.bf16.mxu0 0
        %557 = vmatpush1.bf16.msra.mxu0 %v292
        %558 = vmatprep.subr.bf16.mxu0 0
        %559 = vmatpush1.bf16.msra.mxu0 %v291
        %560 = vmatprep.subr.bf16.mxu0 0
        %561 = vmatpush1.bf16.msra.mxu0 %v290
        %562 = vmatprep.subr.bf16.mxu0 0
        %563 = vmatpush1.bf16.msra.mxu0 %v289
        %564 = vmatprep.subr.bf16.mxu0 0
        %565 = vmatpush1.bf16.msra.mxu0 %v288
        %566 = vmatprep.subr.bf16.mxu0 0
        %567 = vmatpush2.bf16.msra.mxu0 0
        %568 = vmatprep.subr.bf16.mxu0 0
        %569 = vmatpush2.bf16.msra.mxu0 0
        %570 = vmatprep.subr.bf16.mxu0 0
        %571 = vmatpush2.bf16.msra.mxu0 0
        %572 = vmatprep.subr.bf16.mxu0 0
        %573 = vmatpush2.bf16.msra.mxu0 0
        %574 = vmatprep.subr.bf16.mxu0 0
        %575 = vmatpush2.bf16.msra.mxu0 0
        %576 = vmatprep.subr.bf16.mxu0 0
        %577 = vmatpush2.bf16.msra.mxu0 0
        %578 = vmatprep.subr.bf16.mxu0 0
        %579 = vmatpush2.bf16.msra.mxu0 0
        %580 = vmatprep.subr.bf16.mxu0 0
        %581 = vmatpush2.bf16.msra.mxu0 0
        %582 = vmatprep.mubr.bf16.mxu0 0
        %583 = vmatmul.mubr.bf16.gmra.mxu0 %v549
        %v584 = vpop.f32.mrf.mxu0
        %v585 = vadd.f32 %v253, %v584
        %v586 = vpop.f32.mrf.mxu0
        %v587 = vpop.f32.mrf.mxu0
        %v588 = vpop.f32.mrf.mxu0
        %589 = vdwg.mxu0
        %v590 = vpack.c.bf16 %v585, %v585
        %591 = vmatprep.subr.bf16.mxu0 0
        %592 = vmatpush1.bf16.msra.mxu0 %v295
        %593 = vmatprep.subr.bf16.mxu0 0
        %594 = vmatpush1.bf16.msra.mxu0 %v294
        %595 = vmatprep.subr.bf16.mxu0 0
        %596 = vmatpush1.bf16.msra.mxu0 %v293
        %597 = vmatprep.subr.bf16.mxu0 0
        %598 = vmatpush1.bf16.msra.mxu0 %v292
        %599 = vmatprep.subr.bf16.mxu0 0
        %600 = vmatpush1.bf16.msra.mxu0 %v291
        %601 = vmatprep.subr.bf16.mxu0 0
        %602 = vmatpush1.bf16.msra.mxu0 %v290
        %603 = vmatprep.subr.bf16.mxu0 0
        %604 = vmatpush1.bf16.msra.mxu0 %v289
        %605 = vmatprep.subr.bf16.mxu0 0
        %606 = vmatpush1.bf16.msra.mxu0 %v288
        %607 = vmatprep.subr.bf16.mxu0 0
        %608 = vmatpush2.bf16.msra.mxu0 0
        %609 = vmatprep.subr.bf16.mxu0 0
        %610 = vmatpush2.bf16.msra.mxu0 0
        %611 = vmatprep.subr.bf16.mxu0 0
        %612 = vmatpush2.bf16.msra.mxu0 0
        %613 = vmatprep.subr.bf16.mxu0 0
        %614 = vmatpush2.bf16.msra.mxu0 0
        %615 = vmatprep.subr.bf16.mxu0 0
        %616 = vmatpush2.bf16.msra.mxu0 0
        %617 = vmatprep.subr.bf16.mxu0 0
        %618 = vmatpush2.bf16.msra.mxu0 0
        %619 = vmatprep.subr.bf16.mxu0 0
        %620 = vmatpush2.bf16.msra.mxu0 0
        %621 = vmatprep.subr.bf16.mxu0 0
        %622 = vmatpush2.bf16.msra.mxu0 0
        %623 = vmatprep.mubr.bf16.mxu0 0
        %624 = vmatmul.mubr.bf16.gmra.mxu0 %v590
        %v625 = vpop.f32.mrf.mxu0
        %v626 = vadd.f32 %v253, %v625
        %v627 = vpop.f32.mrf.mxu0
        %v628 = vpop.f32.mrf.mxu0
        %v629 = vpop.f32.mrf.mxu0
        %630 = vdwg.mxu0
        %v631 = vpack.c.bf16 %v626, %v626
        %632 = vmatprep.subr.bf16.mxu0 0
        %633 = vmatpush1.bf16.msra.mxu0 %v295
        %634 = vmatprep.subr.bf16.mxu0 0
        %635 = vmatpush1.bf16.msra.mxu0 %v294
        %636 = vmatprep.subr.bf16.mxu0 0
        %637 = vmatpush1.bf16.msra.mxu0 %v293
        %638 = vmatprep.subr.bf16.mxu0 0
        %639 = vmatpush1.bf16.msra.mxu0 %v292
        %640 = vmatprep.subr.bf16.mxu0 0
        %641 = vmatpush1.bf16.msra.mxu0 %v291
        %642 = vmatprep.subr.bf16.mxu0 0
        %643 = vmatpush1.bf16.msra.mxu0 %v290
        %644 = vmatprep.subr.bf16.mxu0 0
        %645 = vmatpush1.bf16.msra.mxu0 %v289
        %646 = vmatprep.subr.bf16.mxu0 0
        %647 = vmatpush1.bf16.msra.mxu0 %v288
        %648 = vmatprep.subr.bf16.mxu0 0
        %649 = vmatpush2.bf16.msra.mxu0 0
        %650 = vmatprep.subr.bf16.mxu0 0
        %651 = vmatpush2.bf16.msra.mxu0 0
        %652 = vmatprep.subr.bf16.mxu0 0
        %653 = vmatpush2.bf16.msra.mxu0 0
        %654 = vmatprep.subr.bf16.mxu0 0
        %655 = vmatpush2.bf16.msra.mxu0 0
        %656 = vmatprep.subr.bf16.mxu0 0
        %657 = vmatpush2.bf16.msra.mxu0 0
        %658 = vmatprep.subr.bf16.mxu0 0
        %659 = vmatpush2.bf16.msra.mxu0 0
        %660 = vmatprep.subr.bf16.mxu0 0
        %661 = vmatpush2.bf16.msra.mxu0 0
        %662 = vmatprep.subr.bf16.mxu0 0
        %663 = vmatpush2.bf16.msra.mxu0 0
        %664 = vmatprep.mubr.bf16.mxu0 0
        %665 = vmatmul.mubr.bf16.gmra.mxu0 %v631
        %v666 = vpop.f32.mrf.mxu0
        %v667 = vadd.f32 %v253, %v666
        %v668 = vpop.f32.mrf.mxu0
        %v669 = vpop.f32.mrf.mxu0
        %v670 = vpop.f32.mrf.mxu0
        %671 = vdwg.mxu0
        %v672 = vpack.c.bf16 %v667, %v667
        %673 = vmatprep.subr.bf16.mxu0 0
        %674 = vmatpush1.bf16.msra.mxu0 %v295
        %675 = vmatprep.subr.bf16.mxu0 0
        %676 = vmatpush1.bf16.msra.mxu0 %v294
        %677 = vmatprep.subr.bf16.mxu0 0
        %678 = vmatpush1.bf16.msra.mxu0 %v293
        %679 = vmatprep.subr.bf16.mxu0 0
        %680 = vmatpush1.bf16.msra.mxu0 %v292
        %681 = vmatprep.subr.bf16.mxu0 0
        %682 = vmatpush1.bf16.msra.mxu0 %v291
        %683 = vmatprep.subr.bf16.mxu0 0
        %684 = vmatpush1.bf16.msra.mxu0 %v290
        %685 = vmatprep.subr.bf16.mxu0 0
        %686 = vmatpush1.bf16.msra.mxu0 %v289
        %687 = vmatprep.subr.bf16.mxu0 0
        %688 = vmatpush1.bf16.msra.mxu0 %v288
        %689 = vmatprep.subr.bf16.mxu0 0
        %690 = vmatpush2.bf16.msra.mxu0 0
        %691 = vmatprep.subr.bf16.mxu0 0
        %692 = vmatpush2.bf16.msra.mxu0 0
        %693 = vmatprep.subr.bf16.mxu0 0
        %694 = vmatpush2.bf16.msra.mxu0 0
        %695 = vmatprep.subr.bf16.mxu0 0
        %696 = vmatpush2.bf16.msra.mxu0 0
        %697 = vmatprep.subr.bf16.mxu0 0
        %698 = vmatpush2.bf16.msra.mxu0 0
        %699 = vmatprep.subr.bf16.mxu0 0
        %700 = vmatpush2.bf16.msra.mxu0 0
        %701 = vmatprep.subr.bf16.mxu0 0
        %702 = vmatpush2.bf16.msra.mxu0 0
        %703 = vmatprep.subr.bf16.mxu0 0
        %704 = vmatpush2.bf16.msra.mxu0 0
        %705 = vmatprep.mubr.bf16.mxu0 0
        %706 = vmatmul.mubr.bf16.gmra.mxu0 %v672
        %v707 = vpop.f32.mrf.mxu0
        %v708 = vadd.f32 %v253, %v707
        %v709 = vpop.f32.mrf.mxu0
        %v710 = vpop.f32.mrf.mxu0
        %v711 = vpop.f32.mrf.mxu0
        %712 = vdwg.mxu0
        %713 = vst [vmem:[%s232] sm:$0x1] %v708
        %s714 = sand.u32 %s109, 1
        %s715 = scalar_lea.sflag [#allocation4], %s714
        %s716 = sand.u32 %s109, 1
        %s717 = scalar_lea.vmem [#allocation7], %s716
        // Predicated region
        $region41: #{tpu_custom_call.1} parent=31 // pred_check
          %p718 = pneg %p119
        $region42: #{tpu_custom_call.1} parent=31 // pred_check_branch
          %720 = sbr.rel (%p718) target = $region44
        $region43: #{tpu_custom_call.1} parent=31 // pred_region
          %s722 = ssub.s32 16, 16
          %723 = vsyncadd %s715, %s722
          %s724 = smul.addr %s23, 16
          %s725 = scalar_lea.hbm %s3, %s724
          %s727 = sshll.u32 %s717, 4
          %s728 = int_to_ptr.vmem [resolvable:$true] %s727
          %730 = dma.vmem_to_hbm [thread:$0]  %s728, 16, %s725, %s715
        $region44: #{tpu_custom_call.1} parent=31 // pred_fallthru
          _
      $region32: #{tpu_custom_call.1} parent=5 // pred_fallthru
        _
      %p731 = scmp.le.s32.totalorder 2, %s18
      // Predicated region
      $region45: #{tpu_custom_call.1} parent=5 // pred_check
        %p732 = pneg %p731
      $region46: #{tpu_custom_call.1} parent=5 // pred_check_branch
        %734 = sbr.rel (%p732) target = $region48
      $region47: #{tpu_custom_call.1} parent=5 // pred_region
        %s735 = ssub.s32 %s18, 2
        // Predicated region
        $region49: #{tpu_custom_call.1} parent=47 // pred_check
          %p736 = pneg %p125
        $region50: #{tpu_custom_call.1} parent=47 // pred_check_branch
          %738 = sbr.rel (%p736) target = $region52
        $region51: #{tpu_custom_call.1} parent=47 // pred_region
          %s739 = sand.u32 %s110, 1
          %s740 = scalar_lea.sflag [#allocation4], %s739
          %s741 = sand.u32 %s110, 1
          %s742 = scalar_lea.vmem [#allocation7], %s741
          %743 = dma.done %s740, 16
        $region52: #{tpu_custom_call.1} parent=47 // pred_fallthru
          _
      $region48: #{tpu_custom_call.1} parent=5 // pred_fallthru
        _
    $region6: #{tpu_custom_call.1} parent=1 // loop_footer
      %s22 = sadd.s32 1, %s18
    $region7: #{tpu_custom_call.1} parent=1 // loop_footer_branch
      %17 = sbr.rel target = $region3
    $region8: #{tpu_custom_call.1} parent=1 // loop_exit
      _
    %744 = vsyncpa [#allocation3], 1
    %s745 = scalar_lea.sflag [#allocation3], 1
    %746 = vsyncpa %s745, 1
    %747 = vsyncpa [#allocation6], 1
    %s748 = scalar_lea.sflag [#allocation6], 1
    %749 = vsyncpa %s748, 1
    %750 = vsyncpa [#allocation4], 1
    %s751 = scalar_lea.sflag [#allocation4], 1
    %752 = vsyncpa %s751, 1

</llo_original>
